<compile_context>
chip_gen: v7x
topology: tpu7x:2x2x1
jax: 0.10.0
libtpu: 0.0.40
codegen_flags: <defaults>
</compile_context>

<pallas_src>
import jax
import jax.numpy as jnp
from jax import lax
from jax.experimental import pallas as pl
from jax.experimental.pallas import tpu as pltpu


def mlp_kernel(x_ref, w1_ref, aux_ref, b2_ref, o_ref):
    # Layer 1 on the MXU: x / W1 cast to bf16 at register level (x stays f32 in HBM/VMEM),
    # f32 accumulation.
    h = jnp.dot(x_ref[...].astype(jnp.bfloat16),
                w1_ref[...].astype(jnp.bfloat16),
                preferred_element_type=jnp.float32)            # (tile_b, d1)
    h = h + aux_ref[0:1, :]                                    # + b1 (row 0 of the aux slab)
    h = jnp.maximum(h, 0.01 * h)                               # LeakyReLU(0.01)
    # Layer 2 (d1 -> 1) as a transposed-RHS matmul: (1, d1) . (tile_b, d1)^T -> (1, tile_b).
    # Batch lands on lanes, so the output store is unmasked and lane-dense.
    y = lax.dot_general(aux_ref[1:2, :].astype(jnp.bfloat16),  # w2 (row 1 of the aux slab)
                        h.astype(jnp.bfloat16),
                        dimension_numbers=(((1,), (1,)), ((), ())),
                        preferred_element_type=jnp.float32)    # (1, tile_b)
    o_ref[...] = (y + b2_ref[0]).astype(o_ref.dtype)


def _round_up(n, m):
    return ((n + m - 1) // m) * m


def my_model_forward(x, w1, b1, w2, b2, *, tile_b=8192):
    """x: (B, in_dim); w1: (in_dim, d1); b1: (1, d1); w2: (d1, 1); b2: (1, 1)."""
    B, in_dim = x.shape
    d1 = w1.shape[1]

    x = x.astype(jnp.float32)            # no-op if already f32; no extra pre-cast/pad pass over x
    w1 = w1.astype(jnp.float32)
    # b1 (layer-1 bias) and w2 (layer-2 weights) share one resident (2, d1) VMEM slab.
    aux = jnp.concatenate([b1.reshape(1, d1), w2.reshape(1, d1)], axis=0).astype(jnp.float32)
    b2_s = b2.reshape(1).astype(jnp.float32)       # scalar bias, lives in SMEM

    # Batch tiling: big tiles amortize per-grid-step overhead; keep >= 2 steps when there is
    # enough work so ("parallel",) can shard tiles across both v7x TensorCores.
    max_tile = int(min(max(tile_b, 8), 16384))
    n_steps = max(2, pl.cdiv(B, max_tile)) if B > 128 else 1
    tile_b = _round_up(pl.cdiv(B, n_steps), 8)     # f32 x tile -> sublane multiple of 8
    n_tiles = pl.cdiv(B, tile_b)                   # last tile may be ragged (overhang discarded)

    out = pl.pallas_call(
        mlp_kernel,
        out_shape=jax.ShapeDtypeStruct((n_tiles, tile_b), jnp.float32),
        grid_spec=pltpu.PrefetchScalarGridSpec(
            num_scalar_prefetch=0,
            grid=(n_tiles,),
            in_specs=[
                # x tile marches along the batch axis -> double-buffered DMA.
                pl.BlockSpec((tile_b, in_dim), lambda i: (i, 0)),
                # Weights stay resident across grid steps (constant block index).
                pl.BlockSpec((in_dim, d1), lambda i: (0, 0)),
                pl.BlockSpec((2, d1), lambda i: (0, 0)),
                # b2 as a scalar in SMEM (whole array, untiled).
                pl.BlockSpec(memory_space=pltpu.MemorySpace.SMEM),
            ],
            # Lane-dense output: one full row of the (n_tiles, tile_b) result per step.
            out_specs=pl.BlockSpec((1, tile_b), lambda i: (i, 0)),
        ),
        compiler_params=pltpu.CompilerParams(
            dimension_semantics=("parallel",),      # megacore sharding on v7x
            vmem_limit_bytes=32 * 1024 * 1024,      # above v5e's 16 MiB scoped default
        ),
    )(x, w1, aux, b2_s)

    # (n_tiles, tile_b) -> (B,): drop ragged-tile garbage and apply x.squeeze(1).
    return out.reshape(-1)[:B]


def init_params(key, input_dim, d1=64):
    # PyTorch nn.Linear-style init, transposed so the kernel computes x @ W.
    k1, k2, k3, k4 = jax.random.split(key, 4)
    bound1 = 1.0 / (input_dim ** 0.5)
    w1 = jax.random.uniform(k1, (input_dim, d1), jnp.float32, -bound1, bound1)
    b1 = jax.random.uniform(k2, (1, d1), jnp.float32, -bound1, bound1)
    bound2 = 1.0 / (d1 ** 0.5)
    w2 = jax.random.uniform(k3, (d1, 1), jnp.float32, -bound2, bound2)
    b2 = jax.random.uniform(k4, (1, 1), jnp.float32, -bound2, bound2)
    return w1, b1, w2, b2


def _reference(x, w1, b1, w2, b2):
    # True f32 reference (matches the PyTorch module); the kernel feeds bf16 to the MXU, so
    # comparisons below use ~1e-2 tolerances.
    h = jnp.dot(x, w1, precision=lax.Precision.HIGHEST) + b1.reshape(1, -1)
    h = jnp.where(h >= 0.0, h, 0.01 * h)
    y = jnp.dot(h, w2.reshape(-1, 1), precision=lax.Precision.HIGHEST) + b2.reshape(1, 1)
    return y[:, 0]


if __name__ == "__main__":
    key = jax.random.PRNGKey(0)
    kx1, kx2, kx3, kp = jax.random.split(key, 4)

    input_dim = 32
    w1, b1, w2, b2 = init_params(kp, input_dim)

    # 1) Tiny batch: single grid step.
    x1 = jax.random.normal(kx1, (8, input_dim), jnp.float32)
    y1 = jax.block_until_ready(my_model_forward(x1, w1, b1, w2, b2))
    assert y1.shape == (8,)
    assert jnp.allclose(y1, _reference(x1, w1, b1, w2, b2), atol=1e-2, rtol=1e-2)

    # 2) Multi-tile with a ragged last tile (exercises the cdiv grid + lane-dense out blocks).
    x2 = jax.random.normal(kx2, (200, input_dim), jnp.float32)
    y2 = jax.block_until_ready(my_model_forward(x2, w1, b1, w2, b2, tile_b=64))
    assert y2.shape == (200,)
    assert jnp.allclose(y2, _reference(x2, w1, b1, w2, b2), atol=1e-2, rtol=1e-2)

    # 3) Default tiling path (two parallel 1024-row tiles -> both v7x TCs busy).
    x3 = jax.random.normal(kx3, (2048, input_dim), jnp.float32)
    y3 = jax.block_until_ready(my_model_forward(x3, w1, b1, w2, b2))
    assert y3.shape == (2048,)
    assert jnp.allclose(y3, _reference(x3, w1, b1, w2, b2), atol=1e-2, rtol=1e-2)

    print("KERNEL_OK")
</pallas_src>

<mosaic_0001>
module attributes {stable_mosaic.version = 11 : i64} {
  func.func @mlp_kernel(%arg0: i32, %arg1: memref<8x32xf32, #tpu.memory_space<vmem>>, %arg2: memref<32x64xf32, #tpu.memory_space<vmem>>, %arg3: memref<2x64xf32, #tpu.memory_space<vmem>>, %arg4: memref<1xf32, #tpu.memory_space<smem>>, %arg5: memref<1x8xf32, #tpu.memory_space<vmem>>) attributes {dimension_semantics = [#tpu.dimension_semantics<parallel>], iteration_bounds = array<i64: 1>, scalar_prefetch = 0 : i64, scratch_operands = 0 : i64, tpu.core_type = #tpu.core_type<tc>, window_params = [{transform_indices = @transform_0, window_bounds = array<i64: 8, 32>}, {pipeline_mode = #tpu.pipeline_mode<synchronous>, transform_indices = @transform_1, window_bounds = array<i64: 32, 64>}, {pipeline_mode = #tpu.pipeline_mode<synchronous>, transform_indices = @transform_2, window_bounds = array<i64: 2, 64>}, {transform_indices = @transform_3, window_bounds = array<i64: 1>}, {transform_indices = @transform_4, window_bounds = array<i64: 1, 8>}]} {
    %c0 = arith.constant 0 : index
    %c0_0 = arith.constant 0 : index
    %0 = vector.load %arg1[%c0, %c0_0] : memref<8x32xf32, #tpu.memory_space<vmem>>, vector<8x32xf32>
    %1 = arith.truncf %0 : vector<8x32xf32> to vector<8x32xbf16>
    %c0_1 = arith.constant 0 : index
    %c0_2 = arith.constant 0 : index
    %2 = vector.load %arg2[%c0_1, %c0_2] : memref<32x64xf32, #tpu.memory_space<vmem>>, vector<32x64xf32>
    %3 = arith.truncf %2 : vector<32x64xf32> to vector<32x64xbf16>
    %cst = arith.constant dense<0.000000e+00> : vector<8x64xf32>
    %4 = tpu.matmul %1, %3, %cst {dimension_numbers = #tpu.dot_dimension_numbers<[1], [0], [0], [1], [0, 0, 1, 1], [], []>} : vector<8x32xbf16>, vector<32x64xbf16>, vector<8x64xf32> -> vector<8x64xf32>
    %c0_3 = arith.constant 0 : index
    %c0_4 = arith.constant 0 : index
    %5 = vector.load %arg3[%c0_3, %c0_4] : memref<2x64xf32, #tpu.memory_space<vmem>>, vector<1x64xf32>
    %6 = vector.broadcast %5 : vector<1x64xf32> to vector<8x64xf32>
    %7 = arith.addf %4, %6 : vector<8x64xf32>
    %cst_5 = arith.constant 0.00999999977 : f32
    %8 = vector.broadcast %cst_5 : f32 to vector<8x64xf32>
    %9 = arith.mulf %8, %7 : vector<8x64xf32>
    %10 = arith.maximumf %7, %9 : vector<8x64xf32>
    %c1 = arith.constant 1 : index
    %c0_6 = arith.constant 0 : index
    %11 = vector.load %arg3[%c1, %c0_6] : memref<2x64xf32, #tpu.memory_space<vmem>>, vector<1x64xf32>
    %12 = arith.truncf %11 : vector<1x64xf32> to vector<1x64xbf16>
    %13 = arith.truncf %10 : vector<8x64xf32> to vector<8x64xbf16>
    %cst_7 = arith.constant dense<0.000000e+00> : vector<1x8xf32>
    %14 = tpu.matmul %12, %13, %cst_7 {dimension_numbers = #tpu.dot_dimension_numbers<[1], [1], [0], [0], [0, 0, 1, 0], [], []>} : vector<1x64xbf16>, vector<8x64xbf16>, vector<1x8xf32> -> vector<1x8xf32>
    %c0_8 = arith.constant 0 : index
    %15 = memref.load %arg4[%c0_8] : memref<1xf32, #tpu.memory_space<smem>>
    %16 = vector.broadcast %15 : f32 to vector<1x8xf32>
    %17 = arith.addf %14, %16 : vector<1x8xf32>
    %c0_9 = arith.constant 0 : index
    %c0_10 = arith.constant 0 : index
    %18 = vector.load %arg5[%c0_9, %c0_10] : memref<1x8xf32, #tpu.memory_space<vmem>>, vector<1x8xf32>
    tpu.vector_store %arg5[%c0_9, %c0_10], %17 {strides = array<i32>} : memref<1x8xf32, #tpu.memory_space<vmem>>, vector<1x8xf32>,
    return
  }
  func.func @transform_0(%arg0: i32) -> (i32, i32) {
    %c0_i32 = arith.constant 0 : i32
    %c0_i32_0 = arith.constant 0 : i32
    return %arg0, %c0_i32 : i32, i32
  }
  func.func @transform_1(%arg0: i32) -> (i32, i32) {
    %c0_i32 = arith.constant 0 : i32
    %c0_i32_0 = arith.constant 0 : i32
    %c0_i32_1 = arith.constant 0 : i32
    return %c0_i32, %c0_i32_0 : i32, i32
  }
  func.func @transform_2(%arg0: i32) -> (i32, i32) {
    %c0_i32 = arith.constant 0 : i32
    %c0_i32_0 = arith.constant 0 : i32
    %c0_i32_1 = arith.constant 0 : i32
    return %c0_i32, %c0_i32_0 : i32, i32
  }
  func.func @transform_3(%arg0: i32) -> i32 {
    %c0_i32 = arith.constant 0 : i32
    %c0_i32_0 = arith.constant 0 : i32
    return %c0_i32 : i32
  }
  func.func @transform_4(%arg0: i32) -> (i32, i32) {
    %c0_i32 = arith.constant 0 : i32
    %c0_i32_0 = arith.constant 0 : i32
    return %arg0, %c0_i32 : i32, i32
  }
}

</mosaic_0001>

<llo_original>
// kernel: tpu_custom_call.1
$region0: #{tpu_custom_call.1}
  #allocation0 [shape = 'u32[]', space=smem, size = 0x4, offset = 0x4, fixed_abs, tag = 'smem constant byte address 0x4 - core index']
  #allocation1 [shape = 'u32[144,128]{1,0:T(1,128)}', space=vmem, size = 0x12000, scoped, tag = 'internal scratch']
  #allocation2 [shape = 'f32[1]{0:T(128)S(6)}', space=smem, size = 0x200, scoped, tag = 'scoped memory for tpu_custom_call.1']
  %s0 = inlined_call_operand.hbm [shape: f32[8,32], index: 0, kind: input, shape index: {}]
  %s1 = inlined_call_operand.hbm [shape: f32[32,64], index: 1, kind: input, shape index: {}]
  %s2 = inlined_call_operand.vmem [shape: f32[2,64], index: 2, kind: input, shape index: {}]
  %s3 = inlined_call_operand.<no memory space> [shape: f32[1], index: 3, kind: input, shape index: {}]
  %s4 = inlined_call_operand.hbm [shape: f32[1,8], index: 4, kind: output, shape index: {}]
  %s5 = sld [smem:[#allocation0]]
  $region34: #{tpu_custom_call.1} parent=0
    _
  %s7 = ssub.s32 1, %s5
  %s8 = scalar_select 0, %s7, %s5
  %9 = sst [smem:[#allocation2]] %s3
  $region1: #{tpu_custom_call.1} parent=0
    #allocation3 [shape = 'u8[4096]{0}', space=vmem, size = 0x1000, scoped, tag = 'input window, operand 0, single buffered']
    #allocation4 [shape = 's32[1]{0}', space=sflag, size = 0x4, scoped, tag = 'scoped memory for tpu_custom_call.1']
    #allocation5 [shape = 's32[1]{0}', space=sflag, size = 0x4, scoped, tag = 'scoped memory for tpu_custom_call.1']
    #allocation6 [shape = 'u8[16384]{0}', space=vmem, size = 0x4000, scoped, tag = 'input window, operand 1, single buffered']
    #allocation7 [shape = 's32[1]{0}', space=sflag, size = 0x4, scoped, tag = 'scoped memory for tpu_custom_call.1']
    #allocation8 [shape = 'u8[512]{0}', space=vmem, size = 0x400, scoped, tag = 'output window, operand 0, single buffered']
    %10 = vsyncpa [#allocation4], 0
    %11 = vsyncpa [#allocation7], 0
    %12 = vsyncpa [#allocation5], 0
    // Predicated region
    $region2: #{tpu_custom_call.1} parent=1 // pred_check
      _
    $region3: #{tpu_custom_call.1} parent=1 // pred_check_branch
      %14 = sbr.rel (0) target = $region5
    $region4: #{tpu_custom_call.1} parent=1 // pred_region
      %s16 = ssub.s32 128, 128
      %17 = vsyncadd [#allocation4], %s16
      %s19 = sshll.u32 [#allocation3], 4
      %s20 = int_to_ptr.vmem [resolvable:$true] %s19
      %22 = dma.hbm_to_vmem [thread:$0]  %s0, 128, %s20, [#allocation4]
    $region5: #{tpu_custom_call.1} parent=1 // pred_fallthru
      _
    // Predicated region
    $region6: #{tpu_custom_call.1} parent=1 // pred_check
      _
    $region7: #{tpu_custom_call.1} parent=1 // pred_check_branch
      %24 = sbr.rel (0) target = $region9
    $region8: #{tpu_custom_call.1} parent=1 // pred_region
      %s26 = ssub.s32 512, 512
      %27 = vsyncadd [#allocation7], %s26
      %s28 = sshll.u32 [#allocation6], 4
      %s29 = int_to_ptr.vmem [resolvable:$true] %s28
      %34 = dma.hbm_to_vmem [thread:$0]  %s1, 512, %s29, [#allocation7], 128, 128, 8
    $region9: #{tpu_custom_call.1} parent=1 // pred_fallthru
      _
    // Predicated region
    $region10: #{tpu_custom_call.1} parent=1 // pred_check
      _
    $region11: #{tpu_custom_call.1} parent=1 // pred_check_branch
      %36 = sbr.rel (0) target = $region13
    $region12: #{tpu_custom_call.1} parent=1 // pred_region
      _
    $region13: #{tpu_custom_call.1} parent=1 // pred_fallthru
      _
    // Predicated region
    $region14: #{tpu_custom_call.1} parent=1 // pred_check
      _
    $region15: #{tpu_custom_call.1} parent=1 // pred_check_branch
      %38 = sbr.rel (0) target = $region17
    $region16: #{tpu_custom_call.1} parent=1 // pred_region
      _
    $region17: #{tpu_custom_call.1} parent=1 // pred_fallthru
      _
    // Predicated region
    $region18: #{tpu_custom_call.1} parent=1 // pred_check
      _
    $region19: #{tpu_custom_call.1} parent=1 // pred_check_branch
      %40 = sbr.rel (0) target = $region21
    $region20: #{tpu_custom_call.1} parent=1 // pred_region
      %41 = dma.done [#allocation4], 128
    $region21: #{tpu_custom_call.1} parent=1 // pred_fallthru
      _
    // Predicated region
    $region22: #{tpu_custom_call.1} parent=1 // pred_check
      _
    $region23: #{tpu_custom_call.1} parent=1 // pred_check_branch
      %43 = sbr.rel (0) target = $region25
    $region24: #{tpu_custom_call.1} parent=1 // pred_region
      %44 = dma.done [#allocation7], 512
    $region25: #{tpu_custom_call.1} parent=1 // pred_fallthru
      _
    %v46 = vld [vmem:[#allocation3] sm:$0xff]
    %v47 = vpack.c.bf16 %v46, %v46
    %v48 = vld [vmem:[#allocation6] sm:$0xff]
    %v49 = vld [vmem:[#allocation6 + $0x8] sm:$0xff]
    %v50 = vld [vmem:[#allocation6 + $0x10] sm:$0xff]
    %v51 = vld [vmem:[#allocation6 + $0x18] sm:$0xff]
    %v52 = vpack.c.bf16 %v49, %v48
    %v53 = vpack.c.bf16 %v51, %v50
    %v54 = vld [vmem:[%s2] sm:$0x1]
    %v55 = vlaneseq
    %v56 = vshrl.u32 %v55, 7
    %v57 = vsub.s32 0, %v56
    %v58 = vrot.slane %v54, %v57
    %vm59 = vcmask 261120
    %v61 = vsel %vm59, %v47, 0
    %63 = vmatprep.subr.bf16.mxu0 0
    %64 = vmatpush1.bf16.msra.mxu0 %v52
    %65 = vmatprep.subr.bf16.mxu0 0
    %66 = vmatpush1.bf16.msra.mxu0 %v53
    %67 = vmatprep.subr.bf16.mxu0 0
    %68 = vmatpush1.bf16.msra.mxu0 0
    %69 = vmatprep.subr.bf16.mxu0 0
    %70 = vmatpush1.bf16.msra.mxu0 0
    %71 = vmatprep.subr.bf16.mxu0 0
    %72 = vmatpush1.bf16.msra.mxu0 0
    %73 = vmatprep.subr.bf16.mxu0 0
    %74 = vmatpush1.bf16.msra.mxu0 0
    %75 = vmatprep.subr.bf16.mxu0 0
    %76 = vmatpush1.bf16.msra.mxu0 0
    %77 = vmatprep.subr.bf16.mxu0 0
    %78 = vmatpush1.bf16.msra.mxu0 0
    %79 = vmatprep.subr.bf16.mxu0 0
    %80 = vmatpush1.bf16.msra.mxu0 0
    %81 = vmatprep.subr.bf16.mxu0 0
    %82 = vmatpush1.bf16.msra.mxu0 0
    %83 = vmatprep.subr.bf16.mxu0 0
    %84 = vmatpush1.bf16.msra.mxu0 0
    %85 = vmatprep.subr.bf16.mxu0 0
    %86 = vmatpush1.bf16.msra.mxu0 0
    %87 = vmatprep.subr.bf16.mxu0 0
    %88 = vmatpush1.bf16.msra.mxu0 0
    %89 = vmatprep.subr.bf16.mxu0 0
    %90 = vmatpush1.bf16.msra.mxu0 0
    %91 = vmatprep.subr.bf16.mxu0 0
    %92 = vmatpush1.bf16.msra.mxu0 0
    %93 = vmatprep.subr.bf16.mxu0 0
    %94 = vmatpush1.bf16.msra.mxu0 0
    %95 = vmatprep.mubr.bf16.mxu0 0
    %96 = vmatmul.mubr.bf16.gmra.mrb[0].mxu0 %v61
    %v97 = vpop.f32.mrb[0].mxu0
    %v98 = vadd.f32 %v58, %v97
    %v99 = vpop.f32.mrb[0].mxu0
    %v100 = vpop.f32.mrb[0].mxu0
    %v101 = vpop.f32.mrb[0].mxu0
    %102 = vdwg.mxu0
    %v103 = vmul.f32 %v98, 0.01
    %v104 = vmax.f32 %v98, %v103
    %v105 = vld [vmem:[%s2 + $0x1] sm:$0x1]
    %v106 = vpack.c.bf16 %v105, %v105
    %v107 = vpack.c.bf16 %v104, %v104
    %s108 = sld [smem:[#allocation2]]
    %v109 = vstv %s108
    %vm110 = vcmask 523264
    %v112 = vsel %vm110, %v106, 0
    %v115 = vsel %vm110, %v107, 0
    %117 = vmatprep.subr.bf16.mxu0 0
    %118 = vmatpush1.bf16.xpose.msra.mxu0 %v115
    %119 = vmatprep.subr.bf16.mxu0 0
    %120 = vmatpush1.bf16.xpose.msra.mxu0 0
    %121 = vmatprep.subr.bf16.mxu0 0
    %122 = vmatpush1.bf16.xpose.msra.mxu0 0
    %123 = vmatprep.subr.bf16.mxu0 0
    %124 = vmatpush1.bf16.xpose.msra.mxu0 0
    %125 = vmatprep.subr.bf16.mxu0 0
    %126 = vmatpush1.bf16.xpose.msra.mxu0 0
    %127 = vmatprep.subr.bf16.mxu0 0
    %128 = vmatpush1.bf16.xpose.msra.mxu0 0
    %129 = vmatprep.subr.bf16.mxu0 0
    %130 = vmatpush1.bf16.xpose.msra.mxu0 0
    %131 = vmatprep.subr.bf16.mxu0 0
    %132 = vmatpush1.bf16.xpose.msra.mxu0 0
    %133 = vmatprep.subr.bf16.mxu0 0
    %134 = vmatpush1.bf16.xpose.msra.mxu0 0
    %135 = vmatprep.subr.bf16.mxu0 0
    %136 = vmatpush1.bf16.xpose.msra.mxu0 0
    %137 = vmatprep.subr.bf16.mxu0 0
    %138 = vmatpush1.bf16.xpose.msra.mxu0 0
    %139 = vmatprep.subr.bf16.mxu0 0
    %140 = vmatpush1.bf16.xpose.msra.mxu0 0
    %141 = vmatprep.subr.bf16.mxu0 0
    %142 = vmatpush1.bf16.xpose.msra.mxu0 0
    %143 = vmatprep.subr.bf16.mxu0 0
    %144 = vmatpush1.bf16.xpose.msra.mxu0 0
    %145 = vmatprep.subr.bf16.mxu0 0
    %146 = vmatpush1.bf16.xpose.msra.mxu0 0
    %147 = vmatprep.subr.bf16.mxu0 0
    %148 = vmatpush1.bf16.xpose.msra.mxu0 0
    %149 = vmatprep.mubr.bf16.mxu0 0
    %150 = vmatmul.mubr.bf16.gmra.mrb[0].mxu0 %v112
    %v151 = vpop.f32.mrb[0].mxu0
    %v152 = vadd.f32 %v109, %v151
    %v153 = vpop.f32.mrb[0].mxu0
    %v154 = vpop.f32.mrb[0].mxu0
    %v155 = vpop.f32.mrb[0].mxu0
    %156 = vdwg.mxu0
    %vm157 = vcmask 57344
    %158 = vst.msk [vmem:[#allocation8] sm:$0x1] %vm157, %v152
    // Predicated region
    $region26: #{tpu_custom_call.1} parent=1 // pred_check
      _
    $region27: #{tpu_custom_call.1} parent=1 // pred_check_branch
      %160 = sbr.rel (0) target = $region29
    $region28: #{tpu_custom_call.1} parent=1 // pred_region
      %s162 = ssub.s32 16, 16
      %163 = vsyncadd [#allocation5], %s162
      %s165 = sshll.u32 [#allocation8], 4
      %s166 = int_to_ptr.vmem [resolvable:$true] %s165
      %168 = dma.vmem_to_hbm [thread:$0]  %s166, 16, %s4, [#allocation5]
    $region29: #{tpu_custom_call.1} parent=1 // pred_fallthru
      _
    // Predicated region
    $region30: #{tpu_custom_call.1} parent=1 // pred_check
      _
    $region31: #{tpu_custom_call.1} parent=1 // pred_check_branch
      %170 = sbr.rel (0) target = $region33
    $region32: #{tpu_custom_call.1} parent=1 // pred_region
      %171 = dma.done [#allocation5], 16
    $region33: #{tpu_custom_call.1} parent=1 // pred_fallthru
      _
    %172 = vsyncpa [#allocation4], 1
    %173 = vsyncpa [#allocation7], 1
    %174 = vsyncpa [#allocation5], 1

</llo_original>
